<compile_context>
chip_gen: v5e
topology: v5e:2x2
jax: 0.10.0
libtpu: 0.0.40
codegen_flags: <defaults>
</compile_context>

<pallas_src>
import jax
import jax.numpy as jnp
from jax.experimental import pallas as pl
from jax.experimental.pallas import tpu as pltpu


def _round_up(x: int, m: int) -> int:
    return ((x + m - 1) // m) * m


def _mix32(x):
    # lowbias32 integer hash (Chris Wellons) -- pure uint32 VPU ops.
    x = x ^ (x >> 16)
    x = x * jnp.uint32(0x7FEB352D)
    x = x ^ (x >> 15)
    x = x * jnp.uint32(0x846CA68B)
    x = x ^ (x >> 16)
    return x


def _make_mask_kernel(R, C, t_blk, T, T_pad, intensity, dropout,
                      prefix_tokens, suffix_tokens, periodic_prompt,
                      periodic_width, upper_cb):
    """Builds a kernel specialized on all static parameters (trace-time folding)."""
    rand_thresh = None
    if 0.0 < intensity < 1.0:
        rand_thresh = min(int(intensity * 2 ** 32), 2 ** 32 - 1)
    drop_thresh = None
    if 0.0 < dropout < 1.0:
        drop_thresh = min(int(dropout * 2 ** 32), 2 ** 32 - 1)
    need_rand = (rand_thresh is not None) or (drop_thresh is not None)

    # `mask` is threaded through as either a Python bool (fully-constant fast
    # path, folded at trace time) or a JAX bool array.
    def _and(mask, cond):
        if mask is True:
            return cond
        if mask is False:
            return False
        return mask & cond

    def _or(mask, cond):
        if mask is True:
            return True
        if mask is False:
            return cond
        return mask | cond

    def kernel(seed_ref, out_ref):
        tt = pl.program_id(0)               # T-tile index
        shape = (R, t_blk)                  # R = B*C rows in the sublane axis

        t_idx = jax.lax.broadcasted_iota(jnp.int32, (1, t_blk), 1) + tt * t_blk
        row = jax.lax.broadcasted_iota(jnp.int32, (R, 1), 0)
        c_idx = row % C                     # codebook index (static divisor)

        base = None
        bits1 = None
        if need_rand:
            # Global linear element index -> grid-invariant counter-based RNG.
            seed_u = seed_ref[0].astype(jnp.uint32)
            lin = (row.astype(jnp.uint32) * jnp.uint32(T_pad)
                   + t_idx.astype(jnp.uint32))
            base = lin + seed_u * jnp.uint32(0x9E3779B1)

        # --- base random mask (fast paths resolved at trace time) ---
        if intensity >= 1.0:
            mask = True
        elif intensity <= 0.0:
            mask = False
        else:
            bits1 = _mix32(base ^ jnp.uint32(0x85EBCA77))
            mask = bits1 < jnp.uint32(rand_thresh)

        # --- prefix / suffix inpaint mask ---
        conds = []
        if prefix_tokens > 0:
            conds.append(t_idx < prefix_tokens)
        if suffix_tokens > 0:
            conds.append(t_idx >= (T - suffix_tokens))
        if conds:
            hit = conds[0]
            for c in conds[1:]:
                hit = hit | c
            mask = _and(mask, jnp.logical_not(hit))

        # --- periodic prompt (static divisor -> strength-reduced modulo) ---
        if periodic_prompt > 0:
            p_hit = (t_idx % periodic_prompt) < periodic_width
            mask = _and(mask, jnp.logical_not(p_hit))

        # --- dropout (torch: mask |= rand < dropout, applied after the ANDs) ---
        if dropout >= 1.0:
            mask = True
        elif drop_thresh is not None:
            if bits1 is not None:
                # Cheap independent-enough stream derived from the first hash
                # (1 mul + 1 shift + 1 xor instead of a full second lowbias32).
                bits2 = bits1 * jnp.uint32(0x9E3779B1)
                bits2 = bits2 ^ (bits2 >> 16)
            else:
                bits2 = _mix32(base ^ jnp.uint32(0xC2B2AE3D))
            mask = _or(mask, bits2 < jnp.uint32(drop_thresh))

        # --- upper codebook mask ---
        if upper_cb > 0:
            mask = _or(mask, c_idx >= upper_cb)

        # Single dense int8 store; constant fast paths skip the bool build.
        if mask is True:
            out_ref[...] = jnp.ones(shape, jnp.int8)
        elif mask is False:
            out_ref[...] = jnp.zeros(shape, jnp.int8)
        else:
            out_ref[...] = jnp.broadcast_to(mask, shape).astype(jnp.int8)

    return kernel


def proper_mask_generator(z,
                          rand_mask_intensity: float = 1.0,
                          prefix_s: float = 0.0,
                          suffix_s: float = 0.0,
                          periodic_prompt: int = 0,
                          periodic_width: int = 1,
                          upper_codebook_mask: int = 0,
                          dropout: float = 0.0,
                          hop_length: int = 768,
                          sample_rate: int = 44100,
                          seed: int = 0):
    """JAX/Pallas port of ProperMaskGenerator.forward. Returns bool mask of z.shape."""
    B, C, T = z.shape
    prefix_tokens = int(prefix_s * sample_rate / hop_length)
    suffix_tokens = int(suffix_s * sample_rate / hop_length)

    # Flatten (B, C) into the sublane axis for dense int8 stores; tile only T.
    R = B * C
    T128 = _round_up(T, 128)

    # Block-size derivation: as fat as possible while keeping live u32
    # intermediates (~24 B/elem) well under v7x's 32 MiB scoped VMEM.
    MAX_BLOCK_ELEMS = 256 * 1024
    t_cap = max(128, ((MAX_BLOCK_ELEMS // max(R, 1)) // 128) * 128)
    if T128 > t_cap:
        t_blk = t_cap
    elif T128 >= 512 and (T128 // 2) % 128 == 0:
        # Keep >=2 parallel grid steps so v7x's second TensorCore gets work
        # (free on single-core v5e/v6e: one extra ~0.35 us step).
        t_blk = T128 // 2
    else:
        t_blk = T128
    n_tiles = -(-T128 // t_blk)
    T_pad = n_tiles * t_blk

    kernel = _make_mask_kernel(
        R, C, t_blk, T, T_pad,
        float(rand_mask_intensity), float(dropout),
        prefix_tokens, suffix_tokens,
        int(periodic_prompt), int(periodic_width), int(upper_codebook_mask))

    seed_arr = jnp.array([seed], dtype=jnp.int32)

    out_i8 = pl.pallas_call(
        kernel,
        out_shape=jax.ShapeDtypeStruct((R, T_pad), jnp.int8),
        grid=(n_tiles,),
        in_specs=[pl.BlockSpec(memory_space=pltpu.MemorySpace.SMEM)],  # seed scalar
        out_specs=pl.BlockSpec((R, t_blk), lambda t: (0, t)),
        compiler_params=pltpu.CompilerParams(
            dimension_semantics=("parallel",)),
    )(seed_arr)

    # Reshape back to (B, C, T); slice is a no-op when T is already lane-aligned.
    # The slice + bool view fuse into one tiny XLA op (or consume int8 directly).
    out_i8 = out_i8.reshape(B, C, T_pad)
    if T_pad != T:
        out_i8 = out_i8[:, :, :T]
    return out_i8.astype(jnp.bool_)


if __name__ == "__main__":
    key = jax.random.PRNGKey(0)
    B, C, T = 2, 4, 16                       # (batch, n_codebooks, seq_len)
    z = jax.random.randint(key, (B, C, T), 0, 1024, dtype=jnp.int32)

    # Full feature path: random intensity, prefix/suffix, periodic, dropout, upper CB.
    mask = proper_mask_generator(
        z,
        rand_mask_intensity=0.8,
        prefix_s=0.05,                       # -> int(0.05*44100/768) = 2 prefix tokens
        suffix_s=0.03,                       # -> 1 suffix token
        periodic_prompt=4,
        periodic_width=1,
        upper_codebook_mask=2,
        dropout=0.1,
        seed=0,
    )
    mask = jax.block_until_ready(mask)
    assert mask.shape == (B, C, T) and mask.dtype == jnp.bool_
    # upper_codebook_mask=2 forces codebooks 2,3 fully True
    assert bool(jnp.all(mask[:, 2:, :]))

    # intensity>=1 / dropout==0 fast paths + periodic prompt (deterministic).
    mask2 = proper_mask_generator(z, rand_mask_intensity=1.0, periodic_prompt=4,
                                  periodic_width=1, dropout=0.0, seed=3)
    mask2 = jax.block_until_ready(mask2)
    assert not bool(jnp.any(mask2[:, :, 0::4]))   # periodic positions un-masked
    assert bool(jnp.all(mask2[:, :, 1]))          # non-periodic positions masked

    # Prefix/suffix inpaint path (deterministic).
    mask3 = proper_mask_generator(z, rand_mask_intensity=1.0,
                                  prefix_s=0.05, suffix_s=0.03)
    mask3 = jax.block_until_ready(mask3)
    assert not bool(jnp.any(mask3[:, :, :2]))       # 2 prefix tokens un-masked
    assert not bool(jnp.any(mask3[:, :, T - 1:]))   # 1 suffix token un-masked
    assert bool(jnp.all(mask3[:, :, 2:T - 1]))      # everything else masked

    print("KERNEL_OK")
</pallas_src>

<mosaic_0001>
module attributes {stable_mosaic.version = 11 : i64} {
  func.func @kernel(%arg0: i32, %arg1: memref<1xi32, #tpu.memory_space<smem>>, %arg2: memref<8x128xi8, #tpu.memory_space<vmem>>) attributes {dimension_semantics = [#tpu.dimension_semantics<parallel>], iteration_bounds = array<i64: 1>, scalar_prefetch = 0 : i64, scratch_operands = 0 : i64, tpu.core_type = #tpu.core_type<tc>, window_params = [{transform_indices = @transform_0, window_bounds = array<i64: 1>}, {transform_indices = @transform_1, window_bounds = array<i64: 8, 128>}]} {
    %0 = tpu.iota {dimensions = array<i32: 1>} : vector<1x128xi32>
    %c128_i32 = arith.constant 128 : i32
    %1 = arith.muli %arg0, %c128_i32 : i32
    %2 = vector.broadcast %1 : i32 to vector<1x128xi32>
    %3 = arith.addi %0, %2 : vector<1x128xi32>
    %4 = tpu.iota {dimensions = array<i32: 0>} : vector<8x1xi32>
    %c4_i32 = arith.constant 4 : i32
    %c0_i32 = arith.constant 0 : i32
    %5 = arith.cmpi eq, %c4_i32, %c0_i32 : i32
    %c1_i32 = arith.constant 1 : i32
    %6 = arith.select %5, %c1_i32, %c4_i32 : i32
    %7 = vector.broadcast %6 : i32 to vector<8x1xi32>
    %8 = arith.remsi %4, %7 : vector<8x1xi32>
    %c0_i32_0 = arith.constant 0 : i32
    %9 = vector.broadcast %c0_i32_0 : i32 to vector<8x1xi32>
    %10 = arith.cmpi ne, %8, %9 : vector<8x1xi32>
    %c0_i32_1 = arith.constant 0 : i32
    %11 = vector.broadcast %c0_i32_1 : i32 to vector<8x1xi32>
    %12 = arith.cmpi slt, %8, %11 : vector<8x1xi32>
    %c0_i32_2 = arith.constant 0 : i32
    %13 = arith.cmpi slt, %6, %c0_i32_2 : i32
    %14 = vector.broadcast %13 : i1 to vector<8x1xi1>
    %15 = vector.broadcast %14 : vector<8x1xi1> to vector<8x1xi1>
    %16 = arith.xori %12, %15 : vector<8x1xi1>
    %17 = arith.andi %16, %10 : vector<8x1xi1>
    %18 = vector.broadcast %6 : i32 to vector<8x1xi32>
    %19 = arith.addi %8, %18 : vector<8x1xi32>
    %20 = arith.select %17, %19, %8 : vector<8x1xi1>, vector<8x1xi32>
    %c0 = arith.constant 0 : index
    %21 = memref.load %arg1[%c0] : memref<1xi32, #tpu.memory_space<smem>>
    %c128_i32_3 = arith.constant 128 : i32
    %22 = vector.broadcast %c128_i32_3 : i32 to vector<8x1xi32>
    %23 = arith.muli %4, %22 : vector<8x1xi32>
    %24 = vector.broadcast %23 : vector<8x1xi32> to vector<8x128xi32>
    %25 = vector.broadcast %3 : vector<1x128xi32> to vector<8x128xi32>
    %26 = arith.addi %24, %25 : vector<8x128xi32>
    %c-1640531535_i32 = arith.constant -1640531535 : i32
    %27 = arith.muli %21, %c-1640531535_i32 : i32
    %28 = vector.broadcast %27 : i32 to vector<8x128xi32>
    %29 = arith.addi %26, %28 : vector<8x128xi32>
    %c-2048144777_i32 = arith.constant -2048144777 : i32
    %30 = vector.broadcast %c-2048144777_i32 : i32 to vector<8x128xi32>
    %31 = arith.xori %29, %30 : vector<8x128xi32>
    %c16_i32 = arith.constant 16 : i32
    %32 = vector.broadcast %c16_i32 : i32 to vector<8x128xi32>
    %33 = arith.shrui %31, %32 : vector<8x128xi32>
    %34 = arith.xori %31, %33 : vector<8x128xi32>
    %c2146121005_i32 = arith.constant 2146121005 : i32
    %35 = vector.broadcast %c2146121005_i32 : i32 to vector<8x128xi32>
    %36 = arith.muli %34, %35 : vector<8x128xi32>
    %c15_i32 = arith.constant 15 : i32
    %37 = vector.broadcast %c15_i32 : i32 to vector<8x128xi32>
    %38 = arith.shrui %36, %37 : vector<8x128xi32>
    %39 = arith.xori %36, %38 : vector<8x128xi32>
    %c-2073254261_i32 = arith.constant -2073254261 : i32
    %40 = vector.broadcast %c-2073254261_i32 : i32 to vector<8x128xi32>
    %41 = arith.muli %39, %40 : vector<8x128xi32>
    %c16_i32_4 = arith.constant 16 : i32
    %42 = vector.broadcast %c16_i32_4 : i32 to vector<8x128xi32>
    %43 = arith.shrui %41, %42 : vector<8x128xi32>
    %44 = arith.xori %41, %43 : vector<8x128xi32>
    %c-858993460_i32 = arith.constant -858993460 : i32
    %45 = vector.broadcast %c-858993460_i32 : i32 to vector<8x128xi32>
    %46 = arith.cmpi ult, %44, %45 : vector<8x128xi32>
    %c2_i32 = arith.constant 2 : i32
    %47 = vector.broadcast %c2_i32 : i32 to vector<1x128xi32>
    %48 = arith.cmpi slt, %3, %47 : vector<1x128xi32>
    %c15_i32_5 = arith.constant 15 : i32
    %49 = vector.broadcast %c15_i32_5 : i32 to vector<1x128xi32>
    %50 = arith.cmpi sge, %3, %49 : vector<1x128xi32>
    %51 = arith.ori %48, %50 : vector<1x128xi1>
    %cst = arith.constant dense<true> : vector<1x128xi1>
    %52 = arith.xori %51, %cst : vector<1x128xi1>
    %53 = vector.broadcast %52 : vector<1x128xi1> to vector<8x128xi1>
    %54 = arith.andi %46, %53 : vector<8x128xi1>
    %c4_i32_6 = arith.constant 4 : i32
    %c0_i32_7 = arith.constant 0 : i32
    %55 = arith.cmpi eq, %c4_i32_6, %c0_i32_7 : i32
    %c1_i32_8 = arith.constant 1 : i32
    %56 = arith.select %55, %c1_i32_8, %c4_i32_6 : i32
    %57 = vector.broadcast %56 : i32 to vector<1x128xi32>
    %58 = arith.remsi %3, %57 : vector<1x128xi32>
    %c0_i32_9 = arith.constant 0 : i32
    %59 = vector.broadcast %c0_i32_9 : i32 to vector<1x128xi32>
    %60 = arith.cmpi ne, %58, %59 : vector<1x128xi32>
    %c0_i32_10 = arith.constant 0 : i32
    %61 = vector.broadcast %c0_i32_10 : i32 to vector<1x128xi32>
    %62 = arith.cmpi slt, %58, %61 : vector<1x128xi32>
    %c0_i32_11 = arith.constant 0 : i32
    %63 = arith.cmpi slt, %56, %c0_i32_11 : i32
    %64 = vector.broadcast %63 : i1 to vector<1x128xi1>
    %65 = vector.broadcast %64 : vector<1x128xi1> to vector<1x128xi1>
    %66 = arith.xori %62, %65 : vector<1x128xi1>
    %67 = arith.andi %66, %60 : vector<1x128xi1>
    %68 = vector.broadcast %56 : i32 to vector<1x128xi32>
    %69 = arith.addi %58, %68 : vector<1x128xi32>
    %70 = arith.select %67, %69, %58 : vector<1x128xi1>, vector<1x128xi32>
    %c1_i32_12 = arith.constant 1 : i32
    %71 = vector.broadcast %c1_i32_12 : i32 to vector<1x128xi32>
    %72 = arith.cmpi slt, %70, %71 : vector<1x128xi32>
    %cst_13 = arith.constant dense<true> : vector<1x128xi1>
    %73 = arith.xori %72, %cst_13 : vector<1x128xi1>
    %74 = vector.broadcast %73 : vector<1x128xi1> to vector<8x128xi1>
    %75 = arith.andi %54, %74 : vector<8x128xi1>
    %c-1640531535_i32_14 = arith.constant -1640531535 : i32
    %76 = vector.broadcast %c-1640531535_i32_14 : i32 to vector<8x128xi32>
    %77 = arith.muli %44, %76 : vector<8x128xi32>
    %c16_i32_15 = arith.constant 16 : i32
    %78 = vector.broadcast %c16_i32_15 : i32 to vector<8x128xi32>
    %79 = arith.shrui %77, %78 : vector<8x128xi32>
    %80 = arith.xori %77, %79 : vector<8x128xi32>
    %c429496729_i32 = arith.constant 429496729 : i32
    %81 = vector.broadcast %c429496729_i32 : i32 to vector<8x128xi32>
    %82 = arith.cmpi ult, %80, %81 : vector<8x128xi32>
    %83 = arith.ori %75, %82 : vector<8x128xi1>
    %c2_i32_16 = arith.constant 2 : i32
    %84 = vector.broadcast %c2_i32_16 : i32 to vector<8x1xi32>
    %85 = arith.cmpi sge, %20, %84 : vector<8x1xi32>
    %86 = vector.broadcast %85 : vector<8x1xi1> to vector<8x128xi1>
    %87 = arith.ori %83, %86 : vector<8x128xi1>
    %88 = arith.extui %87 : vector<8x128xi1> to vector<8x128xi8>
    %c0_17 = arith.constant 0 : index
    %c0_18 = arith.constant 0 : index
    %89 = vector.load %arg2[%c0_17, %c0_18] : memref<8x128xi8, #tpu.memory_space<vmem>>, vector<8x128xi8>
    tpu.vector_store %arg2[%c0_17, %c0_18], %88 {strides = array<i32>} : memref<8x128xi8, #tpu.memory_space<vmem>>, vector<8x128xi8>,
    return
  }
  func.func @transform_0(%arg0: i32) -> i32 {
    %c0_i32 = arith.constant 0 : i32
    %c0_i32_0 = arith.constant 0 : i32
    return %c0_i32 : i32
  }
  func.func @transform_1(%arg0: i32) -> (i32, i32) {
    %c0_i32 = arith.constant 0 : i32
    %c0_i32_0 = arith.constant 0 : i32
    return %c0_i32, %arg0 : i32, i32
  }
}

</mosaic_0001>

<llo_original>
// kernel: tpu_custom_call.1
$region0: #{tpu_custom_call.1}
  #allocation0 [shape = 'u32[]', space=smem, size = 0x4, offset = 0x4, fixed_abs, tag = 'smem constant byte address 0x4 - core index']
  #allocation1 [shape = 'u32[72,128]{1,0:T(1,128)}', space=vmem, size = 0x9000, scoped, tag = 'internal scratch']
  #allocation2 [shape = 's32[1]{0:T(128)S(6)}', space=smem, size = 0x200, scoped, tag = 'scoped memory for tpu_custom_call.1']
  %s0 = inlined_call_operand.<no memory space> [shape: s32[1], index: 0, kind: input, shape index: {}]
  %s1 = inlined_call_operand.hbm [shape: s8[8,128], index: 1, kind: output, shape index: {}]
  %s2 = sld [smem:[#allocation0]]
  $region14: #{tpu_custom_call.1} parent=0
    _
  %s4 = ssub.s32 1, %s2
  %s5 = scalar_select 0, %s4, %s2
  %6 = sst [smem:[#allocation2]] %s0
  $region1: #{tpu_custom_call.1} parent=0
    #allocation3 [shape = 'u8[1024]{0}', space=vmem, size = 0x400, scoped, tag = 'output window, operand 0, single buffered']
    #allocation4 [shape = 's32[1]{0}', space=sflag, size = 0x4, scoped, tag = 'scoped memory for tpu_custom_call.1']
    %7 = vsyncpa [#allocation4], 0
    // Predicated region
    $region2: #{tpu_custom_call.1} parent=1 // pred_check
      _
    $region3: #{tpu_custom_call.1} parent=1 // pred_check_branch
      %9 = sbr.rel (0) target = $region5
    $region4: #{tpu_custom_call.1} parent=1 // pred_region
      _
    $region5: #{tpu_custom_call.1} parent=1 // pred_fallthru
      _
    %v12 = vlaneseq
    %v13 = vand.u32 %v12, 127
    %s14 = smul.u32 0, 128
    %v15 = vstv %s14
    %v16 = vadd.s32 %v13, %v15
    %v17 = vlaneseq
    %v18 = vshrl.u32 %v17, 7
    %vm19 = vcmp.lt.s32.totalorder %v18, 0
    %v20 = vsub.s32 0, %v18
    %v21 = vsel %vm19, %v20, %v18
    %v22 = vshrl.u32 %v21, 2
    %v23 = vand.u32 %v21, 3
    %v24 = vsub.s32 0, %v23
    %v25 = vsel %vm19, %v24, %v23
    %vm26 = vcmp.ne.s32.totalorder %v25, 0
    %vm27 = vcmp.lt.s32.totalorder %v25, 0
    %vm28 = vmand %vm27, %vm26
    %v29 = vadd.s32 %v25, 4
    %v30 = vsel %vm28, %v29, %v25
    %s31 = sld [smem:[#allocation2]]
    %v32 = vmul.u32 %v18, 128
    %v33 = vadd.s32 %v32, %v16
    %s34 = smul.u32 %s31, 2654435761
    %v35 = vstv %s34
    %v36 = vadd.s32 %v33, %v35
    %v37 = vxor.u32 %v36, 2246822519
    %v38 = vshrl.u32 %v37, 16
    %v39 = vxor.u32 %v37, %v38
    %v40 = vmul.u32 %v39, 2146121005
    %v41 = vshrl.u32 %v40, 15
    %v42 = vxor.u32 %v40, %v41
    %v43 = vmul.u32 %v42, 2221713035
    %v44 = vshrl.u32 %v43, 16
    %v45 = vxor.u32 %v43, %v44
    %v46 = vadd.s32 %v45, 2147483648
    %vm48 = vcmp.lt.s32.totalorder %v46, 1288490188
    %vm49 = vcmp.lt.s32.totalorder %v16, 2
    %vm50 = vcmp.ge.s32.totalorder %v16, 15
    %vm51 = vmor %vm49, %vm50
    %vm52 = vmxor %vm51, 1
    %v53 = vsel %vm52, 1, 0
    %vm54 = vcmp.eq.s32.totalorder %v53, 1
    %vm55 = vmand %vm48, %vm54
    %vm56 = vcmp.lt.s32.totalorder %v16, 0
    %v57 = vsub.s32 0, %v16
    %v58 = vsel %vm56, %v57, %v16
    %v59 = vshrl.u32 %v58, 2
    %v60 = vand.u32 %v58, 3
    %v61 = vsub.s32 0, %v60
    %v62 = vsel %vm56, %v61, %v60
    %vm63 = vcmp.ne.s32.totalorder %v62, 0
    %vm64 = vcmp.lt.s32.totalorder %v62, 0
    %vm65 = vmand %vm64, %vm63
    %v66 = vadd.s32 %v62, 4
    %v67 = vsel %vm65, %v66, %v62
    %vm68 = vcmp.lt.s32.totalorder %v67, 1
    %vm69 = vmxor %vm68, 1
    %v70 = vsel %vm69, 1, 0
    %vm71 = vcmp.eq.s32.totalorder %v70, 1
    %vm72 = vmand %vm55, %vm71
    %v73 = vmul.u32 %v45, 2654435761
    %v74 = vshrl.u32 %v73, 16
    %v75 = vxor.u32 %v73, %v74
    %v76 = vadd.s32 %v75, 2147483648
    %vm78 = vcmp.lt.s32.totalorder %v76, 2576980377
    %vm79 = vmor %vm72, %vm78
    %vm80 = vcmp.ge.s32.totalorder %v30, 2
    %v81 = vsel %vm80, 1, 0
    %vm82 = vcmp.eq.s32.totalorder %v81, 1
    %vm83 = vmor %vm79, %vm82
    %vm84 = vmpackc.low %vm83, %vm83
    %v85 = vsel %vm84, 16711935, 0
    %v86 = vsel %vm84, 16711935, 0
    %v87 = vpack.c.b8 %v86, %v85
    %vm88 = vnez %v87
    %v89 = vsel %vm88, 16843009, 0
    %90 = vst [vmem:[#allocation3] sm:$0x3] %v89
    // Predicated region
    $region6: #{tpu_custom_call.1} parent=1 // pred_check
      _
    $region7: #{tpu_custom_call.1} parent=1 // pred_check_branch
      %92 = sbr.rel (0) target = $region9
    $region8: #{tpu_custom_call.1} parent=1 // pred_region
      %94 = vsyncadd [#allocation4], 0
      %s96 = sshll.u32 [#allocation3], 4
      %s97 = int_to_ptr.vmem [resolvable:$true] %s96
      %s98 = sshll.u32 %s1, 4
      %s99 = int_to_ptr.hbm [resolvable:$true] %s98
      %101 = dma.vmem_to_hbm [thread:$0]  %s97, 32, %s99, [#allocation4]
    $region9: #{tpu_custom_call.1} parent=1 // pred_fallthru
      _
    // Predicated region
    $region10: #{tpu_custom_call.1} parent=1 // pred_check
      _
    $region11: #{tpu_custom_call.1} parent=1 // pred_check_branch
      %103 = sbr.rel (0) target = $region13
    $region12: #{tpu_custom_call.1} parent=1 // pred_region
      %105 = dma.done [#allocation4], 32
    $region13: #{tpu_custom_call.1} parent=1 // pred_fallthru
      _
    %106 = vsyncpa [#allocation4], 1

</llo_original>
